<compile_context>
chip_gen: v5e
topology: v5e:2x2
jax: 0.10.0
libtpu: 0.0.40
codegen_flags: <defaults>
</compile_context>

<pallas_src>
import functools

import jax
import jax.numpy as jnp
from jax import lax
from jax.experimental import pallas as pl
from jax.experimental.pallas import tpu as pltpu


def _ca_layer_kernel(x_ref, w1_ref, w2_ref, o_ref):
    # x_ref: [Bb, C, HW]   w1_ref: [Cr, C]   w2_ref: [C, Cr]   o_ref: [Bb, C, HW]
    x = x_ref[...]
    hw = x.shape[-1]

    # Global average pool over the spatial (lane) axis, f32 accumulation -> [Bb, C].
    pooled = jnp.sum(x.astype(jnp.float32), axis=-1) * (1.0 / hw)

    # 1x1 conv #1 (bias=False): pooled @ W1^T  ([Bb,C] x [Cr,C]^T -> [Bb,Cr]).
    h = lax.dot_general(pooled, w1_ref[...],
                        dimension_numbers=(((1,), (1,)), ((), ())),
                        preferred_element_type=jnp.float32)
    h = jnp.maximum(h, 0.0)                                   # ReLU

    # 1x1 conv #2 (bias=False): h @ W2^T  ([Bb,Cr] x [C,Cr]^T -> [Bb,C]).
    s = lax.dot_general(h, w2_ref[...],
                        dimension_numbers=(((1,), (1,)), ((), ())),
                        preferred_element_type=jnp.float32)
    s = jax.nn.sigmoid(s)                                     # channel gates [Bb, C]

    # Channel-wise rescale: broadcast the gate over the HW lanes.
    o_ref[...] = (x * s[:, :, None].astype(x.dtype)).astype(o_ref.dtype)


def _pick_batch_block(B, per_image_bytes, target_bytes=4 << 20):
    """Largest divisor of B with tile <= target bytes, keeping >= 2 grid steps
    when B >= 2 so both v7x TensorCores get work."""
    max_bb = max(1, target_bytes // max(per_image_bytes, 1))
    best = 1
    for bb in range(1, B + 1):
        if B % bb != 0 or bb > max_bb:
            continue
        if B >= 2 and (B // bb) < 2:
            continue
        best = bb
    return best


@jax.jit
def ca_layer_forward(x, w1, w2):
    """x: [B, C, H, W]; w1: [C//r, C]; w2: [C, C//r] (PyTorch 1x1 conv weights
    with the trailing 1x1 dims squeezed).  Returns [B, C, H, W]."""
    B, C, H, W = x.shape
    HW = H * W
    xr = x.reshape(B, C, HW)

    itemsize = jnp.dtype(x.dtype).itemsize
    per_image_bytes = C * HW * itemsize
    Bb = _pick_batch_block(B, per_image_bytes)
    num_steps = B // Bb
    tile_bytes = Bb * per_image_bytes

    # Double-buffered input + output tiles, plus resident weights and slack.
    weight_bytes = (w1.size + w2.size) * jnp.dtype(jnp.float32).itemsize
    vmem_needed = 4 * tile_bytes + weight_bytes + (1 << 20)
    vmem_limit = int(min(vmem_needed, 48 << 20)) if vmem_needed > (16 << 20) else None

    cost = pl.CostEstimate(
        flops=2 * B * C * HW + 4 * B * C * w1.shape[0],
        transcendentals=B * C,
        bytes_accessed=2 * B * C * HW * itemsize + weight_bytes,
    )

    # NOTE: block last-two dims (C, HW) equal the full array dims here; if C is
    # not a multiple of 8 or HW not a multiple of 128 when tiling those axes,
    # pad/align explicitly.
    out = pl.pallas_call(
        _ca_layer_kernel,
        out_shape=jax.ShapeDtypeStruct((B, C, HW), x.dtype),
        grid=(num_steps,),
        in_specs=[
            pl.BlockSpec((Bb, C, HW), lambda b: (b, 0, 0)),   # batch-group tile
            pl.BlockSpec(w1.shape, lambda b: (0, 0)),          # resident weights
            pl.BlockSpec(w2.shape, lambda b: (0, 0)),
        ],
        out_specs=pl.BlockSpec((Bb, C, HW), lambda b: (b, 0, 0)),
        compiler_params=pltpu.CompilerParams(
            dimension_semantics=("parallel",),
            vmem_limit_bytes=vmem_limit,
        ),
        cost_estimate=cost,
    )(xr, w1, w2)
    return out.reshape(B, C, H, W)


if __name__ == "__main__":
    # Small shapes consistent with the module (reduction=16 requires C >= 16).
    B, C, H, W = 4, 64, 16, 16
    reduction = 16
    Cr = C // reduction

    key = jax.random.PRNGKey(0)
    kx, k1, k2 = jax.random.split(key, 3)

    x = jax.random.normal(kx, (B, C, H, W), jnp.float32)
    bound1 = 1.0 / (C ** 0.5)
    w1 = jax.random.uniform(k1, (Cr, C), jnp.float32, -bound1, bound1)   # conv1 [out, in]
    bound2 = 1.0 / (Cr ** 0.5)
    w2 = jax.random.uniform(k2, (C, Cr), jnp.float32, -bound2, bound2)   # conv2 [out, in]

    out = ca_layer_forward(x, w1, w2)
    out = jax.block_until_ready(out)

    # Pure-JAX reference of the same math (matches the PyTorch CALayer forward).
    pooled = jnp.mean(x, axis=(2, 3))                  # [B, C]
    h = jnp.maximum(pooled @ w1.T, 0.0)                # [B, C//r]
    s = jax.nn.sigmoid(h @ w2.T)                       # [B, C]
    ref = x * s[:, :, None, None]

    assert out.shape == (B, C, H, W)
    assert jnp.allclose(out, ref, atol=1e-5, rtol=1e-5)

    print("KERNEL_OK")
</pallas_src>

<mosaic_0001>
module attributes {stable_mosaic.version = 11 : i64} {
  func.func @_ca_layer_kernel(%arg0: i32, %arg1: memref<2x64x256xf32, #tpu.memory_space<vmem>>, %arg2: memref<4x64xf32, #tpu.memory_space<vmem>>, %arg3: memref<64x4xf32, #tpu.memory_space<vmem>>, %arg4: memref<2x64x256xf32, #tpu.memory_space<vmem>>) attributes {dimension_semantics = [#tpu.dimension_semantics<parallel>], iteration_bounds = array<i64: 2>, scalar_prefetch = 0 : i64, scratch_operands = 0 : i64, tpu.core_type = #tpu.core_type<tc>, window_params = [{transform_indices = @transform_0, window_bounds = array<i64: 2, 64, 256>}, {pipeline_mode = #tpu.pipeline_mode<synchronous>, transform_indices = @transform_1, window_bounds = array<i64: 4, 64>}, {pipeline_mode = #tpu.pipeline_mode<synchronous>, transform_indices = @transform_2, window_bounds = array<i64: 64, 4>}, {transform_indices = @transform_3, window_bounds = array<i64: 2, 64, 256>}]} {
    %c0 = arith.constant 0 : index
    %c0_0 = arith.constant 0 : index
    %c0_1 = arith.constant 0 : index
    %0 = vector.load %arg1[%c0, %c0_0, %c0_1] : memref<2x64x256xf32, #tpu.memory_space<vmem>>, vector<2x64x256xf32>
    %cst = arith.constant dense<0.000000e+00> : vector<2x64xf32>
    %1 = vector.multi_reduction <add>, %0, %cst [2] : vector<2x64x256xf32> to vector<2x64xf32>
    %cst_2 = arith.constant 3.906250e-03 : f32
    %2 = vector.broadcast %cst_2 : f32 to vector<2x64xf32>
    %3 = arith.mulf %1, %2 : vector<2x64xf32>
    %c0_3 = arith.constant 0 : index
    %c0_4 = arith.constant 0 : index
    %4 = vector.load %arg2[%c0_3, %c0_4] : memref<4x64xf32, #tpu.memory_space<vmem>>, vector<4x64xf32>
    %cst_5 = arith.constant dense<0.000000e+00> : vector<2x4xf32>
    %5 = tpu.matmul %3, %4, %cst_5 {dimension_numbers = #tpu.dot_dimension_numbers<[1], [1], [0], [0], [0, 0, 1, 0], [], []>} : vector<2x64xf32>, vector<4x64xf32>, vector<2x4xf32> -> vector<2x4xf32>
    %cst_6 = arith.constant 0.000000e+00 : f32
    %6 = vector.broadcast %cst_6 : f32 to vector<2x4xf32>
    %7 = arith.maximumf %5, %6 : vector<2x4xf32>
    %c0_7 = arith.constant 0 : index
    %c0_8 = arith.constant 0 : index
    %8 = vector.load %arg3[%c0_7, %c0_8] : memref<64x4xf32, #tpu.memory_space<vmem>>, vector<64x4xf32>
    %cst_9 = arith.constant dense<0.000000e+00> : vector<2x64xf32>
    %9 = tpu.matmul %7, %8, %cst_9 {dimension_numbers = #tpu.dot_dimension_numbers<[1], [1], [0], [0], [0, 0, 1, 0], [], []>} : vector<2x4xf32>, vector<64x4xf32>, vector<2x64xf32> -> vector<2x64xf32>
    %10 = arith.negf %9 : vector<2x64xf32>
    %11 = math.exp %10 : vector<2x64xf32>
    %cst_10 = arith.constant 1.000000e+00 : f32
    %12 = vector.broadcast %cst_10 : f32 to vector<2x64xf32>
    %13 = arith.addf %12, %11 : vector<2x64xf32>
    %14 = arith.divf %12, %13 : vector<2x64xf32>
    %15 = vector.shape_cast %14 : vector<2x64xf32> to vector<2x64x1xf32>
    %16 = vector.broadcast %15 : vector<2x64x1xf32> to vector<2x64x256xf32>
    %17 = arith.mulf %0, %16 : vector<2x64x256xf32>
    %c0_11 = arith.constant 0 : index
    %c0_12 = arith.constant 0 : index
    %c0_13 = arith.constant 0 : index
    %18 = vector.load %arg4[%c0_11, %c0_12, %c0_13] : memref<2x64x256xf32, #tpu.memory_space<vmem>>, vector<2x64x256xf32>
    tpu.vector_store %arg4[%c0_11, %c0_12, %c0_13], %17 {strides = array<i32>} : memref<2x64x256xf32, #tpu.memory_space<vmem>>, vector<2x64x256xf32>,
    return
  }
  func.func @transform_0(%arg0: i32) -> (i32, i32, i32) {
    %c0_i32 = arith.constant 0 : i32
    %c0_i32_0 = arith.constant 0 : i32
    %c0_i32_1 = arith.constant 0 : i32
    return %arg0, %c0_i32, %c0_i32_0 : i32, i32, i32
  }
  func.func @transform_1(%arg0: i32) -> (i32, i32) {
    %c0_i32 = arith.constant 0 : i32
    %c0_i32_0 = arith.constant 0 : i32
    %c0_i32_1 = arith.constant 0 : i32
    return %c0_i32, %c0_i32_0 : i32, i32
  }
  func.func @transform_2(%arg0: i32) -> (i32, i32) {
    %c0_i32 = arith.constant 0 : i32
    %c0_i32_0 = arith.constant 0 : i32
    %c0_i32_1 = arith.constant 0 : i32
    return %c0_i32, %c0_i32_0 : i32, i32
  }
  func.func @transform_3(%arg0: i32) -> (i32, i32, i32) {
    %c0_i32 = arith.constant 0 : i32
    %c0_i32_0 = arith.constant 0 : i32
    %c0_i32_1 = arith.constant 0 : i32
    return %arg0, %c0_i32, %c0_i32_0 : i32, i32, i32
  }
}

</mosaic_0001>

<llo_original>
// kernel: ca_layer_forward.1
$region0: #{ca_layer_forward.1}
  #allocation0 [shape = 'u32[]', space=smem, size = 0x4, offset = 0x4, fixed_abs, tag = 'smem constant byte address 0x4 - core index']
  #allocation1 [shape = 'u32[72,128]{1,0:T(1,128)}', space=vmem, size = 0x9000, scoped, tag = 'internal scratch']
  %s0 = inlined_call_operand.vmem [shape: f32[4,64,256], index: 0, kind: input, shape index: {}]
  %s1 = inlined_call_operand.vmem [shape: f32[4,64], index: 1, kind: input, shape index: {}]
  %s2 = inlined_call_operand.vmem [shape: f32[64,4], index: 2, kind: input, shape index: {}]
  %s3 = inlined_call_operand.vmem [shape: f32[4,64,256], index: 3, kind: output, shape index: {}]
  %s4 = sld [smem:[#allocation0]]
  $region45: #{ca_layer_forward.1} parent=0
    _
  %s6 = ssub.s32 1, %s4
  %s7 = scalar_select 0, %s6, %s4
  loop: start=0, step=1, limit=4
  $region2: #{ca_layer_forward.1} parent=0 // loop_pre_header
    _
  $region3: #{ca_layer_forward.1} parent=0 // loop_header
    %s9 = sphi 0, %s13
    %p10 = scmp.ge.s32.totalorder %s9, 4
    %s19 = sphi 0, %s21
    %s22 = sphi 0, %s19
    %s23 = sphi 0, %s22
    %s39 = sphi 0, %s23
    %s43 = sphi 0, %s43
    %s45 = sphi 0, %s43
    %s46 = sphi 0, %s45
    %s60 = sphi 0, %s46
    %s64 = sphi 0, %s64
    %s66 = sphi 0, %s64
    %s67 = sphi 0, %s66
    %s81 = sphi 0, %s67
    %s87 = sphi 0, %s89
    %s90 = sphi 0, %s87
    %s91 = sphi 0, %s90
    %s107 = sphi 0, %s91
  $region4: #{ca_layer_forward.1} parent=0 // loop_header_branch
    %12 = sbr.rel (%p10) target = $region8
  $region5: #{ca_layer_forward.1} parent=0 // loop_body
    %s14 = ssub.s32 %s9, 1
    %s15 = ssub.s32 %s9, 2
    %s16 = sadd.s32 %s9, 1
    %s17 = ssub.s32 %s9, %s16
    %p18 = scmp.eq.s32.totalorder %s17, 0
    %s20 = sadd.s32 %s19, 1
    %s21 = scalar_select %p18, %s19, %s20
    %p24 = pneg %p18
    %p25 = scmp.eq.s32.totalorder %s9, 1
    %p26 = por %p24, %p25
    %p27 = scmp.ne.s32.totalorder %s19, %s22
    %p28 = scmp.eq.s32.totalorder %s9, 0
    %p29 = por %p27, %p28
    %p30 = scmp.ne.s32.totalorder %s19, %s22
    %p31 = scmp.eq.s32.totalorder %s14, 1
    %p32 = por %p30, %p31
    %p33 = scmp.ne.s32.totalorder %s22, %s23
    %p34 = scmp.eq.s32.totalorder %s14, 0
    %p35 = por %p33, %p34
    %p36 = scmp.ne.s32.totalorder %s22, %s23
    %p37 = scmp.eq.s32.totalorder %s15, 1
    %p38 = por %p36, %p37
    %p40 = scmp.ne.s32.totalorder %s23, %s39
    %p41 = scmp.eq.s32.totalorder %s15, 0
    %p42 = por %p40, %p41
    %s44 = sadd.s32 %s43, 1
    %p47 = scmp.eq.s32.totalorder %s9, 1
    %p48 = scmp.ne.s32.totalorder %s43, %s45
    %p49 = scmp.eq.s32.totalorder %s9, 0
    %p50 = por %p48, %p49
    %p51 = scmp.ne.s32.totalorder %s43, %s45
    %p52 = scmp.eq.s32.totalorder %s14, 1
    %p53 = por %p51, %p52
    %p54 = scmp.ne.s32.totalorder %s45, %s46
    %p55 = scmp.eq.s32.totalorder %s14, 0
    %p56 = por %p54, %p55
    %p57 = scmp.ne.s32.totalorder %s45, %s46
    %p58 = scmp.eq.s32.totalorder %s15, 1
    %p59 = por %p57, %p58
    %p61 = scmp.ne.s32.totalorder %s46, %s60
    %p62 = scmp.eq.s32.totalorder %s15, 0
    %p63 = por %p61, %p62
    %s65 = sadd.s32 %s64, 1
    %p68 = scmp.eq.s32.totalorder %s9, 1
    %p69 = scmp.ne.s32.totalorder %s64, %s66
    %p70 = scmp.eq.s32.totalorder %s9, 0
    %p71 = por %p69, %p70
    %p72 = scmp.ne.s32.totalorder %s64, %s66
    %p73 = scmp.eq.s32.totalorder %s14, 1
    %p74 = por %p72, %p73
    %p75 = scmp.ne.s32.totalorder %s66, %s67
    %p76 = scmp.eq.s32.totalorder %s14, 0
    %p77 = por %p75, %p76
    %p78 = scmp.ne.s32.totalorder %s66, %s67
    %p79 = scmp.eq.s32.totalorder %s15, 1
    %p80 = por %p78, %p79
    %p82 = scmp.ne.s32.totalorder %s67, %s81
    %p83 = scmp.eq.s32.totalorder %s15, 0
    %p84 = por %p82, %p83
    %s85 = ssub.s32 %s9, %s16
    %p86 = scmp.eq.s32.totalorder %s85, 0
    %s88 = sadd.s32 %s87, 1
    %s89 = scalar_select %p86, %s87, %s88
    %p92 = pneg %p86
    %p93 = scmp.eq.s32.totalorder %s9, 1
    %p94 = por %p92, %p93
    %p95 = scmp.ne.s32.totalorder %s87, %s90
    %p96 = scmp.eq.s32.totalorder %s9, 0
    %p97 = por %p95, %p96
    %p98 = scmp.ne.s32.totalorder %s87, %s90
    %p99 = scmp.eq.s32.totalorder %s14, 1
    %p100 = por %p98, %p99
    %p101 = scmp.ne.s32.totalorder %s90, %s91
    %p102 = scmp.eq.s32.totalorder %s14, 0
    %p103 = por %p101, %p102
    %p104 = scmp.ne.s32.totalorder %s90, %s91
    %p105 = scmp.eq.s32.totalorder %s15, 1
    %p106 = por %p104, %p105
    %p108 = scmp.ne.s32.totalorder %s91, %s107
    %p109 = scmp.eq.s32.totalorder %s15, 0
    %p110 = por %p108, %p109
    %p111 = scmp.le.s32.totalorder 1, %s9
    %p112 = scmp.lt.s32.totalorder %s9, 3
    %p113 = pnand %p111, %p112
    %p114 = pneg %p113
    // Predicated region
    $region9: #{ca_layer_forward.1} parent=5 // pred_check
      _
    $region10: #{ca_layer_forward.1} parent=5 // pred_check_branch
      %116 = sbr.rel (%p113) target = $region12
    $region11: #{ca_layer_forward.1} parent=5 // pred_region
      %s117 = ssub.s32 %s9, 1
      // Predicated region
      $region13: #{ca_layer_forward.1} parent=11 // pred_check
        %p118 = pneg %p56
      $region14: #{ca_layer_forward.1} parent=11 // pred_check_branch
        %120 = sbr.rel (%p118) target = $region16
      $region15: #{ca_layer_forward.1} parent=11 // pred_region
        _
      $region16: #{ca_layer_forward.1} parent=11 // pred_fallthru
        _
      // Predicated region
      $region17: #{ca_layer_forward.1} parent=11 // pred_check
        %p121 = pneg %p77
      $region18: #{ca_layer_forward.1} parent=11 // pred_check_branch
        %123 = sbr.rel (%p121) target = $region20
      $region19: #{ca_layer_forward.1} parent=11 // pred_region
        _
      $region20: #{ca_layer_forward.1} parent=11 // pred_fallthru
        _
    $region12: #{ca_layer_forward.1} parent=5 // pred_fallthru
      _
    %p124 = scmp.lt.s32.totalorder %s9, 2
    // Predicated region
    $region21: #{ca_layer_forward.1} parent=5 // pred_check
      %p125 = pneg %p124
    $region22: #{ca_layer_forward.1} parent=5 // pred_check_branch
      %127 = sbr.rel (%p125) target = $region24
    $region23: #{ca_layer_forward.1} parent=5 // pred_region
      // Predicated region
      $region25: #{ca_layer_forward.1} parent=23 // pred_check
        %p128 = pneg %p29
      $region26: #{ca_layer_forward.1} parent=23 // pred_check_branch
        %130 = sbr.rel (%p128) target = $region28
      $region27: #{ca_layer_forward.1} parent=23 // pred_region
        %s131 = smul.u32 2, %s9
        %p132 = scmp.lt.s32.totalorder %s131, 3
        %s133 = scalar_select %p132, %s131, 3
        %s134 = smul.addr %s133, 16
        %s135 = smul.addr %s134, 8
        %s136 = scalar_lea.vmem %s0, %s135
        %s137 = smul.u32 2, %s9
      $region28: #{ca_layer_forward.1} parent=23 // pred_fallthru
        _
    $region24: #{ca_layer_forward.1} parent=5 // pred_fallthru
      _
    %p138 = scmp.le.s32.totalorder 1, %s9
    %p139 = scmp.lt.s32.totalorder %s9, 3
    %p140 = pnand %p138, %p139
    %p141 = pneg %p140
    // Predicated region
    $region29: #{ca_layer_forward.1} parent=5 // pred_check
      _
    $region30: #{ca_layer_forward.1} parent=5 // pred_check_branch
      %143 = sbr.rel (%p140) target = $region32
    $region31: #{ca_layer_forward.1} parent=5 // pred_region
      %s144 = ssub.s32 %s9, 1
      %s145 = smul.u32 2, %s14
      %p146 = scmp.lt.s32.totalorder %s145, 3
      %s147 = scalar_select %p146, %s145, 3
      %s148 = smul.addr %s147, 16
      %s149 = smul.addr %s148, 8
      %s150 = scalar_lea.vmem %s0, %s149
      %p151 = pneg %p35
      %p152 = pneg %p32
      %p153 = pneg %p56
      %p154 = pneg %p53
      %p155 = pneg %p77
      %p156 = pneg %p74
      %p157 = pneg %p103
      %p158 = pneg %p100
      %s159 = smul.u32 2, %s14
      %p160 = scmp.lt.s32.totalorder %s159, 3
      %s161 = scalar_select %p160, %s159, 3
      %s162 = smul.addr %s161, 16
      %s163 = smul.addr %s162, 8
      %s164 = scalar_lea.vmem %s3, %s163
      %s165 = smul.u32 2, %s14
      %p166 = scmp.lt.s32.totalorder %s165, 3
      %s167 = scalar_select %p166, %s165, 3
      %s168 = smul.addr %s167, 16
      %s169 = smul.addr %s168, 8
      %s170 = scalar_lea.vmem %s0, %s169
      %s171 = smul.u32 2, %s14
      %s172 = smul.u32 2, %s14
      %p173 = scmp.lt.s32.totalorder %s172, 3
      %s174 = scalar_select %p173, %s172, 3
      %s175 = smul.addr %s174, 16
      %s176 = smul.addr %s175, 8
      %s177 = scalar_lea.vmem %s3, %s176
      %s178 = smul.u32 2, %s14
      %v179 = vld [vmem:[%s170] sm:$0xff]
      %v180 = vld [vmem:[%s170 + $0x8] sm:$0xff]
      %v181 = vld [vmem:[%s170 + $0x10] sm:$0xff]
      %v182 = vld [vmem:[%s170 + $0x18] sm:$0xff]
      %v183 = vld [vmem:[%s170 + $0x20] sm:$0xff]
      %v184 = vld [vmem:[%s170 + $0x28] sm:$0xff]
      %v185 = vld [vmem:[%s170 + $0x30] sm:$0xff]
      %v186 = vld [vmem:[%s170 + $0x38] sm:$0xff]
      %v187 = vld [vmem:[%s170 + $0x40] sm:$0xff]
      %v188 = vld [vmem:[%s170 + $0x48] sm:$0xff]
      %v189 = vld [vmem:[%s170 + $0x50] sm:$0xff]
      %v190 = vld [vmem:[%s170 + $0x58] sm:$0xff]
      %v191 = vld [vmem:[%s170 + $0x60] sm:$0xff]
      %v192 = vld [vmem:[%s170 + $0x68] sm:$0xff]
      %v193 = vld [vmem:[%s170 + $0x70] sm:$0xff]
      %v194 = vld [vmem:[%s170 + $0x78] sm:$0xff]
      %v195 = vld [vmem:[%s170 + $0x80] sm:$0xff]
      %v196 = vld [vmem:[%s170 + $0x88] sm:$0xff]
      %v197 = vld [vmem:[%s170 + $0x90] sm:$0xff]
      %v198 = vld [vmem:[%s170 + $0x98] sm:$0xff]
      %v199 = vld [vmem:[%s170 + $0xa0] sm:$0xff]
      %v200 = vld [vmem:[%s170 + $0xa8] sm:$0xff]
      %v201 = vld [vmem:[%s170 + $0xb0] sm:$0xff]
      %v202 = vld [vmem:[%s170 + $0xb8] sm:$0xff]
      %v203 = vld [vmem:[%s170 + $0xc0] sm:$0xff]
      %v204 = vld [vmem:[%s170 + $0xc8] sm:$0xff]
      %v205 = vld [vmem:[%s170 + $0xd0] sm:$0xff]
      %v206 = vld [vmem:[%s170 + $0xd8] sm:$0xff]
      %v207 = vld [vmem:[%s170 + $0xe0] sm:$0xff]
      %v208 = vld [vmem:[%s170 + $0xe8] sm:$0xff]
      %v209 = vld [vmem:[%s170 + $0xf0] sm:$0xff]
      %v210 = vld [vmem:[%s170 + $0xf8] sm:$0xff]
      %v211 = vadd.f32 %v179, %v180
      %212 = vadd.xlane.f32.xlu0 %v211
      %v213 = vpop.xlane.xlu0 %212
      %v214 = vadd.f32 %v181, %v182
      %215 = vadd.xlane.f32.xlu0 %v214
      %v216 = vpop.xlane.xlu0 %215
      %v217 = vadd.f32 %v183, %v184
      %218 = vadd.xlane.f32.xlu0 %v217
      %v219 = vpop.xlane.xlu0 %218
      %v220 = vadd.f32 %v185, %v186
      %221 = vadd.xlane.f32.xlu0 %v220
      %v222 = vpop.xlane.xlu0 %221
      %v223 = vadd.f32 %v187, %v188
      %224 = vadd.xlane.f32.xlu0 %v223
      %v225 = vpop.xlane.xlu0 %224
      %v226 = vadd.f32 %v189, %v190
      %227 = vadd.xlane.f32.xlu0 %v226
      %v228 = vpop.xlane.xlu0 %227
      %v229 = vadd.f32 %v191, %v192
      %230 = vadd.xlane.f32.xlu0 %v229
      %v231 = vpop.xlane.xlu0 %230
      %v232 = vadd.f32 %v193, %v194
      %233 = vadd.xlane.f32.xlu0 %v232
      %v234 = vpop.xlane.xlu0 %233
      %v235 = vadd.f32 %v195, %v196
      %236 = vadd.xlane.f32.xlu0 %v235
      %v237 = vpop.xlane.xlu0 %236
      %v238 = vadd.f32 %v197, %v198
      %239 = vadd.xlane.f32.xlu0 %v238
      %v240 = vpop.xlane.xlu0 %239
      %v241 = vadd.f32 %v199, %v200
      %242 = vadd.xlane.f32.xlu0 %v241
      %v243 = vpop.xlane.xlu0 %242
      %v244 = vadd.f32 %v201, %v202
      %245 = vadd.xlane.f32.xlu0 %v244
      %v246 = vpop.xlane.xlu0 %245
      %v247 = vadd.f32 %v203, %v204
      %248 = vadd.xlane.f32.xlu0 %v247
      %v249 = vpop.xlane.xlu0 %248
      %v250 = vadd.f32 %v205, %v206
      %251 = vadd.xlane.f32.xlu0 %v250
      %v252 = vpop.xlane.xlu0 %251
      %v253 = vadd.f32 %v207, %v208
      %254 = vadd.xlane.f32.xlu0 %v253
      %v255 = vpop.xlane.xlu0 %254
      %v256 = vadd.f32 %v209, %v210
      %257 = vadd.xlane.f32.xlu0 %v256
      %v258 = vpop.xlane.xlu0 %257
      %v259 = vmul.f32 %v213, 0.00390625
      %v260 = vmul.f32 %v216, 0.00390625
      %v261 = vmul.f32 %v219, 0.00390625
      %v262 = vmul.f32 %v222, 0.00390625
      %v263 = vmul.f32 %v225, 0.00390625
      %v264 = vmul.f32 %v228, 0.00390625
      %v265 = vmul.f32 %v231, 0.00390625
      %v266 = vmul.f32 %v234, 0.00390625
      %v267 = vmul.f32 %v237, 0.00390625
      %v268 = vmul.f32 %v240, 0.00390625
      %v269 = vmul.f32 %v243, 0.00390625
      %v270 = vmul.f32 %v246, 0.00390625
      %v271 = vmul.f32 %v249, 0.00390625
      %v272 = vmul.f32 %v252, 0.00390625
      %v273 = vmul.f32 %v255, 0.00390625
      %v274 = vmul.f32 %v258, 0.00390625
      %v275 = vld [vmem:[%s1] sm:$0xf]
      %v292 = vlaneseq
      %v293 = vand.u32 %v292, 127
      %v294 = vperm.slane %v259, %v293
      %v295 = vadd.s32 %v293, 4294967288
      %v296 = vperm.slane %v260, %v295
      %vm297 = vcmask 130112
      %v298 = vsel %vm297, %v296, %v294
      %v299 = vadd.s32 %v293, 4294967280
      %v300 = vperm.slane %v261, %v299
      %vm301 = vcmask 195712
      %v302 = vsel %vm301, %v300, %v298
      %v303 = vadd.s32 %v293, 4294967272
      %v304 = vperm.slane %v262, %v303
      %vm305 = vcmask 261312
      %v306 = vsel %vm305, %v304, %v302
      %v307 = vadd.s32 %v293, 4294967264
      %v308 = vperm.slane %v263, %v307
      %vm309 = vcmask 326912
      %v310 = vsel %vm309, %v308, %v306
      %v311 = vadd.s32 %v293, 4294967256
      %v312 = vperm.slane %v264, %v311
      %vm313 = vcmask 392512
      %v314 = vsel %vm313, %v312, %v310
      %v315 = vadd.s32 %v293, 4294967248
      %v316 = vperm.slane %v265, %v315
      %vm317 = vcmask 458112
      %v318 = vsel %vm317, %v316, %v314
      %v319 = vadd.s32 %v293, 4294967240
      %v320 = vperm.slane %v266, %v319
      %vm321 = vcmask 523712
      %v322 = vsel %vm321, %v320, %v318
      %v323 = vperm.slane %v267, %v293
      %v324 = vperm.slane %v268, %v295
      %v325 = vsel %vm297, %v324, %v323
      %v326 = vperm.slane %v269, %v299
      %v327 = vsel %vm301, %v326, %v325
      %v328 = vperm.slane %v270, %v303
      %v329 = vsel %vm305, %v328, %v327
      %v330 = vperm.slane %v271, %v307
      %v331 = vsel %vm309, %v330, %v329
      %v332 = vperm.slane %v272, %v311
      %v333 = vsel %vm313, %v332, %v331
      %v334 = vperm.slane %v273, %v315
      %v335 = vsel %vm317, %v334, %v333
      %v336 = vperm.slane %v274, %v319
      %v337 = vsel %vm321, %v336, %v335
      %vm338 = vcmask 1041409
      %v339 = vsel %vm338, %v337, %v322
      %vm340 = vcmask 523264
      %v341 = vsel %vm340, %v339, 0
      %v344 = vsel %vm340, %v275, 0
      %346 = vmatpush.xpose.msra.mxu0 0.0
      %347 = vmatpush.xpose.msra.mxu0 0.0
      %348 = vmatpush.xpose.msra.mxu0 0.0
      %349 = vmatpush.xpose.msra.mxu0 0.0
      %350 = vmatpush.xpose.msra.mxu0 0.0
      %351 = vmatpush.xpose.msra.mxu0 0.0
      %352 = vmatpush.xpose.msra.mxu0 0.0
      %353 = vmatpush.xpose.msra.mxu0 0.0
      %354 = vmatpush.xpose.msra.mxu0 0.0
      %355 = vmatpush.xpose.msra.mxu0 0.0
      %356 = vmatpush.xpose.msra.mxu0 0.0
      %357 = vmatpush.xpose.msra.mxu0 0.0
      %358 = vmatpush.xpose.msra.mxu0 0.0
      %359 = vmatpush.xpose.msra.mxu0 0.0
      %360 = vmatpush.xpose.msra.mxu0 0.0
      %361 = vmatpush.xpose.msra.mxu0 %v344
      %362 = vmatmul.f32.gmra.mxu0 %v341
      %v363 = vpop.f32.mrf.mxu0
      %v364 = vadd.f32 0.0, %v363
      %365 = vdwg.mxu0
      %v366 = vmax.f32 %v364, 0.0
      %v367 = vld [vmem:[%s2] sm:$0xff]
      %v368 = vld [vmem:[%s2 + $0x8] sm:$0xff]
      %v369 = vld [vmem:[%s2 + $0x10] sm:$0xff]
      %v370 = vld [vmem:[%s2 + $0x18] sm:$0xff]
      %v371 = vld [vmem:[%s2 + $0x20] sm:$0xff]
      %v372 = vld [vmem:[%s2 + $0x28] sm:$0xff]
      %v373 = vld [vmem:[%s2 + $0x30] sm:$0xff]
      %v374 = vld [vmem:[%s2 + $0x38] sm:$0xff]
      %vm375 = vcmask 31744
      %v377 = vsel %vm375, %v366, 0
      %v380 = vsel %vm375, %v367, 0
      %v383 = vsel %vm375, %v368, 0
      %v386 = vsel %vm375, %v369, 0
      %v389 = vsel %vm375, %v370, 0
      %v392 = vsel %vm375, %v371, 0
      %v395 = vsel %vm375, %v372, 0
      %v398 = vsel %vm375, %v373, 0
      %v401 = vsel %vm375, %v374, 0
      %403 = vmatpush.xpose.msra.mxu0 0.0
      %404 = vmatpush.xpose.msra.mxu0 0.0
      %405 = vmatpush.xpose.msra.mxu0 0.0
      %406 = vmatpush.xpose.msra.mxu0 0.0
      %407 = vmatpush.xpose.msra.mxu0 0.0
      %408 = vmatpush.xpose.msra.mxu0 0.0
      %409 = vmatpush.xpose.msra.mxu0 0.0
      %410 = vmatpush.xpose.msra.mxu0 0.0
      %411 = vmatpush.xpose.msra.mxu0 %v401
      %412 = vmatpush.xpose.msra.mxu0 %v398
      %413 = vmatpush.xpose.msra.mxu0 %v395
      %414 = vmatpush.xpose.msra.mxu0 %v392
      %415 = vmatpush.xpose.msra.mxu0 %v389
      %416 = vmatpush.xpose.msra.mxu0 %v386
      %417 = vmatpush.xpose.msra.mxu0 %v383
      %418 = vmatpush.xpose.msra.mxu0 %v380
      %419 = vmatmul.f32.gmra.mxu0 %v377
      %v420 = vpop.f32.mrf.mxu0
      %v421 = vadd.f32 0.0, %v420
      %422 = vdwg.mxu0
      %v423 = vxor.u32 %v421, 2147483648
      %v424 = vmul.f32 %v423, 1.442695
      %v425 = vpow.pop %v424
      %v426 = vadd.f32 %v425, 1.0
      %v427 = vrcp.pop %v426
      %v428 = vmul.f32 %v426, %v427
      %v429 = vsub.f32 1.0, %v428
      %v430 = vmul.f32 %v427, %v429
      %v431 = vadd.f32 %v427, %v430
      %vm432 = vweird.f32 %v426
      %vm433 = vweird.f32 %v427
      %vm434 = vmor %vm432, %vm433
      %v435 = vsel %vm434, %v427, %v431
      %v436 = vand.u32 2147483647, %v426
      %vm437 = vcmp.eq.f32.partialorder %v436, 8.507059e+37
      %v438 = vand.u32 %v426, 2147483648
      %v439 = vor.u32 1.1754944e-38, %v438
      %v440 = vsel %vm437, %v439, %v435
      %v441 = vmul.f32 1.0, %v440
      %v442 = vperm.slane %v441, 0
      %v443 = vlaneseq
      %v444 = vshrl.u32 %v443, 7
      %446 = vset.pattern.permute.xlu0 %v444
      %447 = vperm.xlu0 %446, %v442
      %v448 = vpop.permute.xlu0 %447
      %v449 = vlaneseq
      %v450 = vshrl.u32 %v449, 7
      %v451 = vadd.s32 %v450, 8
      %452 = vset.pattern.permute.xlu0 %v451
      %453 = vperm.xlu0 %452, %v442
      %v454 = vpop.permute.xlu0 %453
      %v455 = vlaneseq
      %v456 = vshrl.u32 %v455, 7
      %v457 = vadd.s32 %v456, 16
      %458 = vset.pattern.permute.xlu0 %v457
      %459 = vperm.xlu0 %458, %v442
      %v460 = vpop.permute.xlu0 %459
      %v461 = vlaneseq
      %v462 = vshrl.u32 %v461, 7
      %v463 = vadd.s32 %v462, 24
      %464 = vset.pattern.permute.xlu0 %v463
      %465 = vperm.xlu0 %464, %v442
      %v466 = vpop.permute.xlu0 %465
      %v467 = vlaneseq
      %v468 = vshrl.u32 %v467, 7
      %v469 = vadd.s32 %v468, 32
      %470 = vset.pattern.permute.xlu0 %v469
      %471 = vperm.xlu0 %470, %v442
      %v472 = vpop.permute.xlu0 %471
      %v473 = vlaneseq
      %v474 = vshrl.u32 %v473, 7
      %v475 = vadd.s32 %v474, 40
      %476 = vset.pattern.permute.xlu0 %v475
      %477 = vperm.xlu0 %476, %v442
      %v478 = vpop.permute.xlu0 %477
      %v479 = vlaneseq
      %v480 = vshrl.u32 %v479, 7
      %v481 = vadd.s32 %v480, 48
      %482 = vset.pattern.permute.xlu0 %v481
      %483 = vperm.xlu0 %482, %v442
      %v484 = vpop.permute.xlu0 %483
      %v485 = vlaneseq
      %v486 = vshrl.u32 %v485, 7
      %v487 = vadd.s32 %v486, 56
      %488 = vset.pattern.permute.xlu0 %v487
      %489 = vperm.xlu0 %488, %v442
      %v490 = vpop.permute.xlu0 %489
      %v491 = vperm.slane %v441, 1
      %v492 = vlaneseq
      %v493 = vshrl.u32 %v492, 7
      %495 = vset.pattern.permute.xlu0 %v493
      %496 = vperm.xlu0 %495, %v491
      %v497 = vpop.permute.xlu0 %496
      %v498 = vlaneseq
      %v499 = vshrl.u32 %v498, 7
      %v500 = vadd.s32 %v499, 8
      %501 = vset.pattern.permute.xlu0 %v500
      %502 = vperm.xlu0 %501, %v491
      %v503 = vpop.permute.xlu0 %502
      %v504 = vlaneseq
      %v505 = vshrl.u32 %v504, 7
      %v506 = vadd.s32 %v505, 16
      %507 = vset.pattern.permute.xlu0 %v506
      %508 = vperm.xlu0 %507, %v491
      %v509 = vpop.permute.xlu0 %508
      %v510 = vlaneseq
      %v511 = vshrl.u32 %v510, 7
      %v512 = vadd.s32 %v511, 24
      %513 = vset.pattern.permute.xlu0 %v512
      %514 = vperm.xlu0 %513, %v491
      %v515 = vpop.permute.xlu0 %514
      %v516 = vlaneseq
      %v517 = vshrl.u32 %v516, 7
      %v518 = vadd.s32 %v517, 32
      %519 = vset.pattern.permute.xlu0 %v518
      %520 = vperm.xlu0 %519, %v491
      %v521 = vpop.permute.xlu0 %520
      %v522 = vlaneseq
      %v523 = vshrl.u32 %v522, 7
      %v524 = vadd.s32 %v523, 40
      %525 = vset.pattern.permute.xlu0 %v524
      %526 = vperm.xlu0 %525, %v491
      %v527 = vpop.permute.xlu0 %526
      %v528 = vlaneseq
      %v529 = vshrl.u32 %v528, 7
      %v530 = vadd.s32 %v529, 48
      %531 = vset.pattern.permute.xlu0 %v530
      %532 = vperm.xlu0 %531, %v491
      %v533 = vpop.permute.xlu0 %532
      %v534 = vlaneseq
      %v535 = vshrl.u32 %v534, 7
      %v536 = vadd.s32 %v535, 56
      %537 = vset.pattern.permute.xlu0 %v536
      %538 = vperm.xlu0 %537, %v491
      %v539 = vpop.permute.xlu0 %538
      %v540 = vmul.f32 %v179, %v448
      %v541 = vmul.f32 %v180, %v448
      %v542 = vmul.f32 %v181, %v454
      %v543 = vmul.f32 %v182, %v454
      %v544 = vmul.f32 %v183, %v460
      %v545 = vmul.f32 %v184, %v460
      %v546 = vmul.f32 %v185, %v466
      %v547 = vmul.f32 %v186, %v466
      %v548 = vmul.f32 %v187, %v472
      %v549 = vmul.f32 %v188, %v472
      %v550 = vmul.f32 %v189, %v478
      %v551 = vmul.f32 %v190, %v478
      %v552 = vmul.f32 %v191, %v484
      %v553 = vmul.f32 %v192, %v484
      %v554 = vmul.f32 %v193, %v490
      %v555 = vmul.f32 %v194, %v490
      %v556 = vmul.f32 %v195, %v497
      %v557 = vmul.f32 %v196, %v497
      %v558 = vmul.f32 %v197, %v503
      %v559 = vmul.f32 %v198, %v503
      %v560 = vmul.f32 %v199, %v509
      %v561 = vmul.f32 %v200, %v509
      %v562 = vmul.f32 %v201, %v515
      %v563 = vmul.f32 %v202, %v515
      %v564 = vmul.f32 %v203, %v521
      %v565 = vmul.f32 %v204, %v521
      %v566 = vmul.f32 %v205, %v527
      %v567 = vmul.f32 %v206, %v527
      %v568 = vmul.f32 %v207, %v533
      %v569 = vmul.f32 %v208, %v533
      %v570 = vmul.f32 %v209, %v539
      %v571 = vmul.f32 %v210, %v539
      %572 = vst [vmem:[%s177] sm:$0xff] %v540
      %573 = vst [vmem:[%s177 + $0x8] sm:$0xff] %v541
      %574 = vst [vmem:[%s177 + $0x10] sm:$0xff] %v542
      %575 = vst [vmem:[%s177 + $0x18] sm:$0xff] %v543
      %576 = vst [vmem:[%s177 + $0x20] sm:$0xff] %v544
      %577 = vst [vmem:[%s177 + $0x28] sm:$0xff] %v545
      %578 = vst [vmem:[%s177 + $0x30] sm:$0xff] %v546
      %579 = vst [vmem:[%s177 + $0x38] sm:$0xff] %v547
      %580 = vst [vmem:[%s177 + $0x40] sm:$0xff] %v548
      %581 = vst [vmem:[%s177 + $0x48] sm:$0xff] %v549
      %582 = vst [vmem:[%s177 + $0x50] sm:$0xff] %v550
      %583 = vst [vmem:[%s177 + $0x58] sm:$0xff] %v551
      %584 = vst [vmem:[%s177 + $0x60] sm:$0xff] %v552
      %585 = vst [vmem:[%s177 + $0x68] sm:$0xff] %v553
      %586 = vst [vmem:[%s177 + $0x70] sm:$0xff] %v554
      %587 = vst [vmem:[%s177 + $0x78] sm:$0xff] %v555
      %588 = vst [vmem:[%s177 + $0x80] sm:$0xff] %v556
      %589 = vst [vmem:[%s177 + $0x88] sm:$0xff] %v557
      %590 = vst [vmem:[%s177 + $0x90] sm:$0xff] %v558
      %591 = vst [vmem:[%s177 + $0x98] sm:$0xff] %v559
      %592 = vst [vmem:[%s177 + $0xa0] sm:$0xff] %v560
      %593 = vst [vmem:[%s177 + $0xa8] sm:$0xff] %v561
      %594 = vst [vmem:[%s177 + $0xb0] sm:$0xff] %v562
      %595 = vst [vmem:[%s177 + $0xb8] sm:$0xff] %v563
      %596 = vst [vmem:[%s177 + $0xc0] sm:$0xff] %v564
      %597 = vst [vmem:[%s177 + $0xc8] sm:$0xff] %v565
      %598 = vst [vmem:[%s177 + $0xd0] sm:$0xff] %v566
      %599 = vst [vmem:[%s177 + $0xd8] sm:$0xff] %v567
      %600 = vst [vmem:[%s177 + $0xe0] sm:$0xff] %v568
      %601 = vst [vmem:[%s177 + $0xe8] sm:$0xff] %v569
      %602 = vst [vmem:[%s177 + $0xf0] sm:$0xff] %v570
      %603 = vst [vmem:[%s177 + $0xf8] sm:$0xff] %v571
      %s604 = smul.u32 2, %s14
      %p605 = scmp.lt.s32.totalorder %s604, 3
      %s606 = scalar_select %p605, %s604, 3
      %s607 = smul.addr %s606, 16
      %s608 = smul.addr %s607, 8
      %s609 = scalar_lea.vmem %s3, %s608
      // Predicated region
      $region33: #{ca_layer_forward.1} parent=31 // pred_check
        %p610 = pneg %p100
      $region34: #{ca_layer_forward.1} parent=31 // pred_check_branch
        %612 = sbr.rel (%p610) target = $region36
      $region35: #{ca_layer_forward.1} parent=31 // pred_region
        %s613 = smul.u32 2, %s14
      $region36: #{ca_layer_forward.1} parent=31 // pred_fallthru
        _
    $region32: #{ca_layer_forward.1} parent=5 // pred_fallthru
      _
    %p614 = scmp.le.s32.totalorder 2, %s9
    // Predicated region
    $region37: #{ca_layer_forward.1} parent=5 // pred_check
      %p615 = pneg %p614
    $region38: #{ca_layer_forward.1} parent=5 // pred_check_branch
      %617 = sbr.rel (%p615) target = $region40
    $region39: #{ca_layer_forward.1} parent=5 // pred_region
      %s618 = ssub.s32 %s9, 2
      // Predicated region
      $region41: #{ca_layer_forward.1} parent=39 // pred_check
        %p619 = pneg %p106
      $region42: #{ca_layer_forward.1} parent=39 // pred_check_branch
        %621 = sbr.rel (%p619) target = $region44
      $region43: #{ca_layer_forward.1} parent=39 // pred_region
        %s622 = smul.u32 2, %s15
        %p623 = scmp.lt.s32.totalorder %s622, 3
        %s624 = scalar_select %p623, %s622, 3
        %s625 = smul.addr %s624, 16
        %s626 = smul.addr %s625, 8
        %s627 = scalar_lea.vmem %s3, %s626
      $region44: #{ca_layer_forward.1} parent=39 // pred_fallthru
        _
    $region40: #{ca_layer_forward.1} parent=5 // pred_fallthru
      _
  $region6: #{ca_layer_forward.1} parent=0 // loop_footer
    %s13 = sadd.s32 1, %s9
  $region7: #{ca_layer_forward.1} parent=0 // loop_footer_branch
    %8 = sbr.rel target = $region3
  $region8: #{ca_layer_forward.1} parent=0 // loop_exit
    _

</llo_original>
